<compile_context>
chip_gen: v7x
topology: tpu7x:2x2x1
jax: 0.10.0
libtpu: 0.0.40
codegen_flags: <defaults>
</compile_context>

<pallas_src>
import jax
import jax.numpy as jnp
from jax.experimental import pallas as pl
from jax.experimental.pallas import tpu as pltpu


def attn_avg_kernel(x_ref, mask_ref, w_ref, b_ref, out_ref, alpha_ref):
    # x_ref:     (TB, T, D)  VMEM, native dtype
    # mask_ref:  (TB, T)     VMEM f32, additive mask (0 / -1e9)
    # w_ref:     (1, D)      VMEM f32, lane-dense Linear weight row
    # b_ref:     (1,)        SMEM f32 scalar bias
    # out_ref:   (TB, D)     VMEM, context output
    # alpha_ref: (TB, T)     VMEM f32, attention weights
    x = x_ref[...].astype(jnp.float32)                          # (TB, T, D)
    w = w_ref[...].astype(jnp.float32)                          # (1, D)
    b = b_ref[0]

    # Linear(D -> 1): VPU broadcast-mul + XLU lane reduce over D (no N=1 MXU).
    s = jnp.sum(x * w[None, :, :], axis=-1)                     # (TB, T)
    s = jnp.tanh(s + b)                                         # EUP tanh

    # Additive mask, then softmax over the sequence axis (lane-dense reduce).
    z = s + mask_ref[...].astype(jnp.float32)                   # (TB, T)
    m = jnp.max(z, axis=-1, keepdims=True)                      # (TB, 1)
    e = jnp.exp(z - m)                                          # (TB, T)
    denom = jnp.sum(e, axis=-1, keepdims=True)                  # (TB, 1)
    r = pl.reciprocal(denom, approx=True)                       # EUP vrcp
    r = r * (2.0 - denom * r)                                   # Newton refine
    alpha = e * r                                               # (TB, T)
    alpha_ref[...] = alpha.astype(alpha_ref.dtype)

    # Context: alpha-weighted sum over T (sublane reduce) -> (TB, D)
    ctx = jnp.sum(alpha[:, :, None] * x, axis=1)                # (TB, D)
    out_ref[...] = ctx.astype(out_ref.dtype)


def _choose_batch_tile(B, T, D, x_itemsize):
    """Largest batch tile whose working set (double-buffered pipeline tiles +
    in-kernel f32 temporaries) fits a VMEM budget safe on v5e/v6e/v7x."""
    pipeline = 2 * (T * D * x_itemsize      # x tile (double-buffered)
                    + 2 * T * 4             # mask + alpha rows
                    + D * 4)                # context output row
    temps = 2 * T * D * 4                   # f32 upcast of x + product temp
    per_batch = pipeline + temps
    budget = 32 * 1024 * 1024
    tb = max(1, budget // per_batch)
    if tb >= B:
        return B
    # TB < B: keep it a multiple of 8 so (TB, T)/(TB, D) blocks tile cleanly.
    tb = (tb // 8) * 8
    if tb == 0:
        # Per-batch footprint is huge; fall back to the smallest legal tile
        # (multiple of 8, or the whole batch) and let vmem_limit cover it.
        tb = min(8, B)
    return tb


def attention_averager(x, mask, weight, bias):
    """x: (B, T, D) (native dtype), mask: (B, T) additive (0 / -1e9),
    weight: (1, D) (torch Linear layout), bias: (1,).
    Returns (output (B, D), alpha (B, T, 1))."""
    B, T, D = x.shape
    mask2 = mask.astype(jnp.float32)                  # (B, T) lane-dense
    w = weight.reshape(1, D).astype(jnp.float32)      # (1, D) lane-dense row
    b = bias.reshape(1).astype(jnp.float32)           # (1,) scalar -> SMEM

    TB = _choose_batch_tile(B, T, D, x.dtype.itemsize)
    grid = (pl.cdiv(B, TB),)

    out, alpha = pl.pallas_call(
        attn_avg_kernel,
        out_shape=(
            jax.ShapeDtypeStruct((B, D), x.dtype),
            jax.ShapeDtypeStruct((B, T), jnp.float32),
        ),
        grid_spec=pltpu.PrefetchScalarGridSpec(
            num_scalar_prefetch=0,
            grid=grid,
            in_specs=[
                pl.BlockSpec((TB, T, D), lambda i: (i, 0, 0)),        # x
                pl.BlockSpec((TB, T), lambda i: (i, 0)),              # mask
                pl.BlockSpec((1, D), lambda i: (0, 0)),               # weight
                pl.BlockSpec(memory_space=pltpu.MemorySpace.SMEM),    # bias
            ],
            out_specs=[
                pl.BlockSpec((TB, D), lambda i: (i, 0)),              # output
                pl.BlockSpec((TB, T), lambda i: (i, 0)),              # alpha
            ],
        ),
        compiler_params=pltpu.CompilerParams(
            dimension_semantics=("parallel",),       # megacore on v7x
            vmem_limit_bytes=48 * 1024 * 1024,
        ),
    )(x, mask2, w, b)

    return out, alpha.reshape(B, T, 1)


def reference(x, mask, weight, bias):
    """Pure-JAX reference mirroring the PyTorch forward."""
    s = jnp.tanh(jnp.einsum("btd,od->bto", x, weight) + bias)       # (B,T,1)
    z = s + mask[..., None]
    alpha = jax.nn.softmax(z, axis=1)                               # (B,T,1)
    out = jnp.einsum("bto,btd->bod", alpha, x)[:, 0, :]             # (B,D)
    return out, alpha


if __name__ == "__main__":
    B, T, D = 2, 8, 32   # batch, seq_len, token_dim

    key = jax.random.PRNGKey(0)
    kx, km, kw, kb = jax.random.split(key, 4)

    x = jax.random.normal(kx, (B, T, D), dtype=jnp.float32)

    # Additive mask: 0 for valid positions, -1e9 for padded positions.
    valid = (jax.random.uniform(km, (B, T)) > 0.25)
    valid = valid.at[:, 0].set(True)          # ensure at least one valid token
    mask = jnp.where(valid, 0.0, -1e9).astype(jnp.float32)

    # Deterministic Linear(D, 1) params (torch layout: weight (1, D), bias (1,)).
    weight = jax.random.normal(kw, (1, D), dtype=jnp.float32) / jnp.sqrt(D)
    bias = jax.random.normal(kb, (1,), dtype=jnp.float32) * 0.01

    out, alpha = attention_averager(x, mask, weight, bias)
    out = jax.block_until_ready(out)
    alpha = jax.block_until_ready(alpha)

    ref_out, ref_alpha = reference(x, mask, weight, bias)
    assert out.shape == (B, D) and alpha.shape == (B, T, 1)
    assert jnp.allclose(out, ref_out, atol=2e-5, rtol=2e-5)
    assert jnp.allclose(alpha, ref_alpha, atol=2e-5, rtol=2e-5)

    print("KERNEL_OK")
</pallas_src>

<mosaic_0001>
module attributes {stable_mosaic.version = 11 : i64} {
  func.func @attn_avg_kernel(%arg0: i32, %arg1: memref<2x8x32xf32, #tpu.memory_space<vmem>>, %arg2: memref<2x8xf32, #tpu.memory_space<vmem>>, %arg3: memref<1x32xf32, #tpu.memory_space<vmem>>, %arg4: memref<1xf32, #tpu.memory_space<smem>>, %arg5: memref<2x32xf32, #tpu.memory_space<vmem>>, %arg6: memref<2x8xf32, #tpu.memory_space<vmem>>) attributes {dimension_semantics = [#tpu.dimension_semantics<parallel>], iteration_bounds = array<i64: 1>, scalar_prefetch = 0 : i64, scratch_operands = 0 : i64, tpu.core_type = #tpu.core_type<tc>, window_params = [{transform_indices = @transform_0, window_bounds = array<i64: 2, 8, 32>}, {transform_indices = @transform_1, window_bounds = array<i64: 2, 8>}, {pipeline_mode = #tpu.pipeline_mode<synchronous>, transform_indices = @transform_2, window_bounds = array<i64: 1, 32>}, {transform_indices = @transform_3, window_bounds = array<i64: 1>}, {transform_indices = @transform_4, window_bounds = array<i64: 2, 32>}, {transform_indices = @transform_5, window_bounds = array<i64: 2, 8>}]} {
    %c0 = arith.constant 0 : index
    %c0_0 = arith.constant 0 : index
    %c0_1 = arith.constant 0 : index
    %0 = vector.load %arg1[%c0, %c0_0, %c0_1] : memref<2x8x32xf32, #tpu.memory_space<vmem>>, vector<2x8x32xf32>
    %c0_2 = arith.constant 0 : index
    %c0_3 = arith.constant 0 : index
    %1 = vector.load %arg3[%c0_2, %c0_3] : memref<1x32xf32, #tpu.memory_space<vmem>>, vector<1x32xf32>
    %c0_4 = arith.constant 0 : index
    %2 = memref.load %arg4[%c0_4] : memref<1xf32, #tpu.memory_space<smem>>
    %3 = vector.shape_cast %1 : vector<1x32xf32> to vector<1x1x32xf32>
    %4 = vector.broadcast %3 : vector<1x1x32xf32> to vector<2x8x32xf32>
    %5 = arith.mulf %0, %4 : vector<2x8x32xf32>
    %cst = arith.constant dense<0.000000e+00> : vector<2x8xf32>
    %6 = vector.multi_reduction <add>, %5, %cst [2] : vector<2x8x32xf32> to vector<2x8xf32>
    %7 = vector.broadcast %2 : f32 to vector<2x8xf32>
    %8 = arith.addf %6, %7 : vector<2x8xf32>
    %9 = math.tanh %8 : vector<2x8xf32>
    %c0_5 = arith.constant 0 : index
    %c0_6 = arith.constant 0 : index
    %10 = vector.load %arg2[%c0_5, %c0_6] : memref<2x8xf32, #tpu.memory_space<vmem>>, vector<2x8xf32>
    %11 = arith.addf %9, %10 : vector<2x8xf32>
    %cst_7 = arith.constant dense<0xFF800000> : vector<2xf32>
    %12 = vector.multi_reduction <maximumf>, %11, %cst_7 [1] : vector<2x8xf32> to vector<2xf32>
    %13 = vector.shape_cast %12 : vector<2xf32> to vector<2x1xf32>
    %14 = vector.broadcast %13 : vector<2x1xf32> to vector<2x8xf32>
    %15 = arith.subf %11, %14 : vector<2x8xf32>
    %16 = math.exp %15 : vector<2x8xf32>
    %cst_8 = arith.constant dense<0.000000e+00> : vector<2xf32>
    %17 = vector.multi_reduction <add>, %16, %cst_8 [1] : vector<2x8xf32> to vector<2xf32>
    %18 = vector.shape_cast %17 : vector<2xf32> to vector<2x1xf32>
    %19 = tpu.reciprocal %18 {approx = true} : vector<2x1xf32> -> vector<2x1xf32>
    %20 = arith.mulf %18, %19 : vector<2x1xf32>
    %cst_9 = arith.constant 2.000000e+00 : f32
    %21 = vector.broadcast %cst_9 : f32 to vector<2x1xf32>
    %22 = arith.subf %21, %20 : vector<2x1xf32>
    %23 = arith.mulf %19, %22 : vector<2x1xf32>
    %24 = vector.broadcast %23 : vector<2x1xf32> to vector<2x8xf32>
    %25 = arith.mulf %16, %24 : vector<2x8xf32>
    %c0_10 = arith.constant 0 : index
    %c0_11 = arith.constant 0 : index
    %26 = vector.load %arg6[%c0_10, %c0_11] : memref<2x8xf32, #tpu.memory_space<vmem>>, vector<2x8xf32>
    tpu.vector_store %arg6[%c0_10, %c0_11], %25 {strides = array<i32>} : memref<2x8xf32, #tpu.memory_space<vmem>>, vector<2x8xf32>,
    %27 = vector.shape_cast %25 : vector<2x8xf32> to vector<2x8x1xf32>
    %28 = vector.broadcast %27 : vector<2x8x1xf32> to vector<2x8x32xf32>
    %29 = arith.mulf %28, %0 : vector<2x8x32xf32>
    %cst_12 = arith.constant dense<0.000000e+00> : vector<2x32xf32>
    %30 = vector.multi_reduction <add>, %29, %cst_12 [1] : vector<2x8x32xf32> to vector<2x32xf32>
    %c0_13 = arith.constant 0 : index
    %c0_14 = arith.constant 0 : index
    %31 = vector.load %arg5[%c0_13, %c0_14] : memref<2x32xf32, #tpu.memory_space<vmem>>, vector<2x32xf32>
    tpu.vector_store %arg5[%c0_13, %c0_14], %30 {strides = array<i32>} : memref<2x32xf32, #tpu.memory_space<vmem>>, vector<2x32xf32>,
    return
  }
  func.func @transform_0(%arg0: i32) -> (i32, i32, i32) {
    %c0_i32 = arith.constant 0 : i32
    %c0_i32_0 = arith.constant 0 : i32
    %c0_i32_1 = arith.constant 0 : i32
    return %arg0, %c0_i32, %c0_i32_0 : i32, i32, i32
  }
  func.func @transform_1(%arg0: i32) -> (i32, i32) {
    %c0_i32 = arith.constant 0 : i32
    %c0_i32_0 = arith.constant 0 : i32
    return %arg0, %c0_i32 : i32, i32
  }
  func.func @transform_2(%arg0: i32) -> (i32, i32) {
    %c0_i32 = arith.constant 0 : i32
    %c0_i32_0 = arith.constant 0 : i32
    %c0_i32_1 = arith.constant 0 : i32
    return %c0_i32, %c0_i32_0 : i32, i32
  }
  func.func @transform_3(%arg0: i32) -> i32 {
    %c0_i32 = arith.constant 0 : i32
    %c0_i32_0 = arith.constant 0 : i32
    return %c0_i32 : i32
  }
  func.func @transform_4(%arg0: i32) -> (i32, i32) {
    %c0_i32 = arith.constant 0 : i32
    %c0_i32_0 = arith.constant 0 : i32
    return %arg0, %c0_i32 : i32, i32
  }
  func.func @transform_5(%arg0: i32) -> (i32, i32) {
    %c0_i32 = arith.constant 0 : i32
    %c0_i32_0 = arith.constant 0 : i32
    return %arg0, %c0_i32 : i32, i32
  }
}

</mosaic_0001>

<llo_original>
// kernel: tpu_custom_call.1
$region0: #{tpu_custom_call.1}
  #allocation0 [shape = 'u32[]', space=smem, size = 0x4, offset = 0x4, fixed_abs, tag = 'smem constant byte address 0x4 - core index']
  #allocation1 [shape = 'u32[144,128]{1,0:T(1,128)}', space=vmem, size = 0x12000, scoped, tag = 'internal scratch']
  #allocation2 [shape = 'f32[1]{0:T(128)S(6)}', space=smem, size = 0x200, scoped, tag = 'scoped memory for tpu_custom_call.1']
  %s0 = inlined_call_operand.hbm [shape: f32[2,8,32], index: 0, kind: input, shape index: {}]
  %s1 = inlined_call_operand.vmem [shape: f32[2,8], index: 1, kind: input, shape index: {}]
  %s2 = inlined_call_operand.vmem [shape: f32[1,32], index: 2, kind: input, shape index: {}]
  %s3 = inlined_call_operand.<no memory space> [shape: f32[1], index: 3, kind: input, shape index: {}]
  %s4 = inlined_call_operand.hbm [shape: f32[2,32], index: 4, kind: output, shape index: {0}]
  %s5 = inlined_call_operand.hbm [shape: f32[2,8], index: 5, kind: output, shape index: {1}]
  %6 = xla_tuple %s4, %s5
  %s7 = sld [smem:[#allocation0]]
  $region38: #{tpu_custom_call.1} parent=0
    _
  %s9 = ssub.s32 1, %s7
  %s10 = scalar_select 0, %s9, %s7
  %11 = sst [smem:[#allocation2]] %s3
  $region1: #{tpu_custom_call.1} parent=0
    #allocation3 [shape = 'u8[8192]{0}', space=vmem, size = 0x2000, scoped, tag = 'input window, operand 0, single buffered']
    #allocation4 [shape = 's32[1]{0}', space=sflag, size = 0x4, scoped, tag = 'scoped memory for tpu_custom_call.1']
    #allocation5 [shape = 's32[1]{0}', space=sflag, size = 0x4, scoped, tag = 'scoped memory for tpu_custom_call.1']
    #allocation6 [shape = 'u8[1024]{0}', space=vmem, size = 0x400, scoped, tag = 'output window, operand 0, single buffered']
    #allocation7 [shape = 'u8[1024]{0}', space=vmem, size = 0x400, scoped, tag = 'output window, operand 1, single buffered']
    #allocation8 [shape = 's32[1]{0}', space=sflag, size = 0x4, scoped, tag = 'scoped memory for tpu_custom_call.1']
    %12 = vsyncpa [#allocation4], 0
    %13 = vsyncpa [#allocation5], 0
    %14 = vsyncpa [#allocation8], 0
    // Predicated region
    $region2: #{tpu_custom_call.1} parent=1 // pred_check
      _
    $region3: #{tpu_custom_call.1} parent=1 // pred_check_branch
      %16 = sbr.rel (0) target = $region5
    $region4: #{tpu_custom_call.1} parent=1 // pred_region
      %s18 = ssub.s32 256, 256
      %19 = vsyncadd [#allocation4], %s18
      %s20 = sshll.u32 [#allocation3], 4
      %s21 = int_to_ptr.vmem [resolvable:$true] %s20
      %26 = dma.hbm_to_vmem [thread:$0]  %s0, 256, %s21, [#allocation4], 128, 128, 8
    $region5: #{tpu_custom_call.1} parent=1 // pred_fallthru
      _
    // Predicated region
    $region6: #{tpu_custom_call.1} parent=1 // pred_check
      _
    $region7: #{tpu_custom_call.1} parent=1 // pred_check_branch
      %28 = sbr.rel (0) target = $region9
    $region8: #{tpu_custom_call.1} parent=1 // pred_region
      _
    $region9: #{tpu_custom_call.1} parent=1 // pred_fallthru
      _
    // Predicated region
    $region10: #{tpu_custom_call.1} parent=1 // pred_check
      _
    $region11: #{tpu_custom_call.1} parent=1 // pred_check_branch
      %30 = sbr.rel (0) target = $region13
    $region12: #{tpu_custom_call.1} parent=1 // pred_region
      _
    $region13: #{tpu_custom_call.1} parent=1 // pred_fallthru
      _
    // Predicated region
    $region14: #{tpu_custom_call.1} parent=1 // pred_check
      _
    $region15: #{tpu_custom_call.1} parent=1 // pred_check_branch
      %32 = sbr.rel (0) target = $region17
    $region16: #{tpu_custom_call.1} parent=1 // pred_region
      _
    $region17: #{tpu_custom_call.1} parent=1 // pred_fallthru
      _
    // Predicated region
    $region18: #{tpu_custom_call.1} parent=1 // pred_check
      _
    $region19: #{tpu_custom_call.1} parent=1 // pred_check_branch
      %34 = sbr.rel (0) target = $region21
    $region20: #{tpu_custom_call.1} parent=1 // pred_region
      %35 = dma.done [#allocation4], 256
    $region21: #{tpu_custom_call.1} parent=1 // pred_fallthru
      _
    %v36 = vld [vmem:[#allocation3] sm:$0xff]
    %v37 = vld [vmem:[#allocation3 + $0x8] sm:$0xff]
    %v38 = vld [vmem:[%s2] sm:$0x1]
    %s39 = sld [smem:[#allocation2]]
    %v41 = vlaneseq
    %v42 = vshrl.u32 %v41, 7
    %v43 = vsub.s32 0, %v42
    %v44 = vrot.slane %v38, %v43
    %v46 = vmul.f32 %v36, %v44
    %v47 = vmul.f32 %v37, %v44
    %vm48 = vcmask 261120
    %v49 = vsel %vm48, %v46, 0.0
    %50 = vadd.xlane.f32.xlu0 %v49
    %v51 = vpop.xlane.xlu0 %50
    %v52 = vsel %vm48, %v47, 0.0
    %53 = vadd.xlane.f32.xlu0 %v52
    %v54 = vpop.xlane.xlu0 %53
    %v55 = vstv %s39
    %v56 = vadd.f32 %v51, %v55
    %v57 = vadd.f32 %v54, %v55
    %v58 = vtanh.pop %v56
    %v59 = vtanh.pop %v57
    %v60 = vld [vmem:[%s1] sm:$0x3]
    %v62 = vlaneseq
    %v63 = vshrl.u32 %v62, 7
    %v64 = vsub.s32 0, %v63
    %v65 = vrot.slane %v60, %v64
    %67 = vbcast.lane.b32.xlu0 %v65, 256
    %v68 = vpop.permute.xlu0 %67
    %v69 = vlaneseq
    %v70 = vshrl.u32 %v69, 7
    %v71 = vsub.s32 1, %v70
    %v72 = vrot.slane %v60, %v71
    %74 = vbcast.lane.b32.xlu0 %v72, 256
    %v75 = vpop.permute.xlu0 %74
    %v78 = vadd.f32 %v58, %v68
    %v79 = vadd.f32 %v59, %v75
    %82 = vset.pattern.permute.xlu0 0
    %83 = vperm.xlu0 %82, %v78
    %v84 = vpop.permute.xlu0 %83
    %85 = vset.pattern.permute.xlu0 0
    %86 = vperm.xlu0 %85, %v79
    %v87 = vpop.permute.xlu0 %86
    %v88 = vlaneseq
    %v89 = vand.u32 %v88, 127
    %v90 = vlaneseq
    %v91 = vshrl.u32 %v90, 7
    %v92 = vsub.s32 %v89, %v91
    %v93 = vrot.slane %v84, %v92
    %v94 = vlaneseq
    %v95 = vshrl.u32 %v94, 7
    %v96 = vsub.s32 %v89, %v95
    %v97 = vrot.slane %v87, %v96
    %vm98 = vcmask 1041409
    %v99 = vsel %vm98, %v97, %v93
    %vm101 = vcmask 58368
    %v102 = vsel %vm101, %v99, -inf
    %103 = vmax.xlane.f32.xlu0 %v102
    %v104 = vpop.xlane.xlu0 %103
    %v106 = vlaneseq
    %v107 = vshrl.u32 %v106, 7
    %v108 = vsub.s32 0, %v107
    %v109 = vrot.slane %v104, %v108
    %v110 = vlaneseq
    %v111 = vshrl.u32 %v110, 7
    %v112 = vsub.s32 1, %v111
    %v113 = vrot.slane %v104, %v112
    %v116 = vsub.f32 %v78, %v109
    %v117 = vsub.f32 %v79, %v113
    %v118 = vmul.f32 %v116, 1.442695
    %v119 = vpow.pop %v118
    %v120 = vmul.f32 %v117, 1.442695
    %v121 = vpow.pop %v120
    %124 = vset.pattern.permute.xlu0 0
    %125 = vperm.xlu0 %124, %v119
    %v126 = vpop.permute.xlu0 %125
    %127 = vset.pattern.permute.xlu0 0
    %128 = vperm.xlu0 %127, %v121
    %v129 = vpop.permute.xlu0 %128
    %v130 = vlaneseq
    %v131 = vshrl.u32 %v130, 7
    %v132 = vsub.s32 %v89, %v131
    %v133 = vrot.slane %v126, %v132
    %v134 = vlaneseq
    %v135 = vshrl.u32 %v134, 7
    %v136 = vsub.s32 %v89, %v135
    %v137 = vrot.slane %v129, %v136
    %v138 = vsel %vm98, %v137, %v133
    %v140 = vsel %vm101, %v138, 0.0
    %141 = vadd.xlane.f32.xlu0 %v140
    %v142 = vpop.xlane.xlu0 %141
    %v143 = vrcp.pop %v142
    %v144 = vmul.f32 %v142, %v143
    %v145 = vsub.f32 2.0, %v144
    %v146 = vmul.f32 %v143, %v145
    %v148 = vlaneseq
    %v149 = vshrl.u32 %v148, 7
    %v150 = vsub.s32 0, %v149
    %v151 = vrot.slane %v146, %v150
    %v152 = vlaneseq
    %v153 = vshrl.u32 %v152, 7
    %v154 = vsub.s32 1, %v153
    %v155 = vrot.slane %v146, %v154
    %v158 = vmul.f32 %v119, %v151
    %v159 = vmul.f32 %v121, %v155
    %162 = vset.pattern.permute.xlu0 0
    %163 = vperm.xlu0 %162, %v158
    %v164 = vpop.permute.xlu0 %163
    %165 = vset.pattern.permute.xlu0 0
    %166 = vperm.xlu0 %165, %v159
    %v167 = vpop.permute.xlu0 %166
    %v168 = vlaneseq
    %v169 = vshrl.u32 %v168, 7
    %v170 = vsub.s32 %v89, %v169
    %v171 = vrot.slane %v164, %v170
    %v172 = vlaneseq
    %v173 = vshrl.u32 %v172, 7
    %v174 = vsub.s32 %v89, %v173
    %v175 = vrot.slane %v167, %v174
    %v176 = vsel %vm98, %v175, %v171
    %178 = vst.msk [vmem:[#allocation7] sm:$0x3] %vm101, %v176
    %v181 = vmul.f32 %v164, %v36
    %v182 = vmul.f32 %v167, %v37
    %v183 = vsel %vm48, %v181, 0.0
    %v184 = vrot.slane %v183, 4
    %v185 = vadd.f32 %v183, %v184
    %v186 = vrot.slane %v185, 2
    %v187 = vadd.f32 %v185, %v186
    %v188 = vrot.slane %v187, 1
    %v189 = vadd.f32 %v187, %v188
    %v190 = vsel %vm48, %v182, 0.0
    %v191 = vrot.slane %v190, 4
    %v192 = vadd.f32 %v190, %v191
    %v193 = vrot.slane %v192, 2
    %v194 = vadd.f32 %v192, %v193
    %v195 = vrot.slane %v194, 1
    %v196 = vadd.f32 %v194, %v195
    %v199 = vsel %vm98, %v196, %v189
    %vm201 = vcmask 254976
    %202 = vst.msk [vmem:[#allocation6] sm:$0x3] %vm201, %v199
    // Predicated region
    $region22: #{tpu_custom_call.1} parent=1 // pred_check
      _
    $region23: #{tpu_custom_call.1} parent=1 // pred_check_branch
      %204 = sbr.rel (0) target = $region25
    $region24: #{tpu_custom_call.1} parent=1 // pred_region
      %s206 = ssub.s32 32, 32
      %207 = vsyncadd [#allocation5], %s206
      %s209 = sshll.u32 [#allocation6], 4
      %s210 = int_to_ptr.vmem [resolvable:$true] %s209
      %212 = dma.vmem_to_hbm [thread:$0]  %s210, 32, %s4, [#allocation5]
    $region25: #{tpu_custom_call.1} parent=1 // pred_fallthru
      _
    // Predicated region
    $region26: #{tpu_custom_call.1} parent=1 // pred_check
      _
    $region27: #{tpu_custom_call.1} parent=1 // pred_check_branch
      %214 = sbr.rel (0) target = $region29
    $region28: #{tpu_custom_call.1} parent=1 // pred_region
      %s216 = ssub.s32 32, 32
      %217 = vsyncadd [#allocation8], %s216
      %s219 = sshll.u32 [#allocation7], 4
      %s220 = int_to_ptr.vmem [resolvable:$true] %s219
      %222 = dma.vmem_to_hbm [thread:$0]  %s220, 32, %s5, [#allocation8]
    $region29: #{tpu_custom_call.1} parent=1 // pred_fallthru
      _
    // Predicated region
    $region30: #{tpu_custom_call.1} parent=1 // pred_check
      _
    $region31: #{tpu_custom_call.1} parent=1 // pred_check_branch
      %224 = sbr.rel (0) target = $region33
    $region32: #{tpu_custom_call.1} parent=1 // pred_region
      %225 = dma.done [#allocation5], 32
    $region33: #{tpu_custom_call.1} parent=1 // pred_fallthru
      _
    // Predicated region
    $region34: #{tpu_custom_call.1} parent=1 // pred_check
      _
    $region35: #{tpu_custom_call.1} parent=1 // pred_check_branch
      %227 = sbr.rel (0) target = $region37
    $region36: #{tpu_custom_call.1} parent=1 // pred_region
      %228 = dma.done [#allocation8], 32
    $region37: #{tpu_custom_call.1} parent=1 // pred_fallthru
      _
    %229 = vsyncpa [#allocation4], 1
    %230 = vsyncpa [#allocation5], 1
    %231 = vsyncpa [#allocation8], 1

</llo_original>
